<compile_context>
chip_gen: v7x
topology: tpu7x:2x2x1
jax: 0.10.0
libtpu: 0.0.40
codegen_flags: <defaults>
</compile_context>

<pallas_src>
import jax
import jax.numpy as jnp
from jax.experimental import pallas as pl
from jax.experimental.pallas import tpu as pltpu

NUM_BITS = 8                        # config.activation_num_bits
NUM_BINS = float(2 ** NUM_BITS - 1)
EPS = 1e-8
LANES = 128
SUBLANES = 8
GROUP = SUBLANES * LANES            # 1024 elems = one (8,128) f32 vreg tile
MAX_TILE_GROUPS = 128               # 128 * 4 KiB = 512 KiB per grid step
FUSED_MAX_BYTES = 2 * 1024 * 1024   # keep whole slab VMEM-resident below this


def _fused_kernel(x_ref, o_ref):
    """Single-pass: min/max on the VMEM-resident slab, then quant-dequant."""
    x = x_ref[...].astype(jnp.float32)
    mn = jnp.min(x) - EPS            # zero_point
    mx = jnp.max(x) + EPS
    scale = NUM_BINS / (mx - mn)
    inv_scale = (mx - mn) / NUM_BINS
    q = jnp.round(jnp.clip((x - mn) * scale, 0.0, NUM_BINS))
    o_ref[...] = (q * inv_scale + mn).astype(o_ref.dtype)


def _minmax_partial_kernel(x_ref, part_ref):
    """Pass 1 (large tensors): vreg-wide (8,128) elementwise min/max accumulators."""
    @pl.when(pl.program_id(0) == 0)
    def _():
        part_ref[0, :, :] = jnp.full((SUBLANES, LANES), jnp.inf, dtype=jnp.float32)
        part_ref[1, :, :] = jnp.full((SUBLANES, LANES), -jnp.inf, dtype=jnp.float32)

    x = x_ref[...].astype(jnp.float32)            # (tile_g, 8, 128)
    part_ref[0, :, :] = jnp.minimum(part_ref[0, :, :], jnp.min(x, axis=0))
    part_ref[1, :, :] = jnp.maximum(part_ref[1, :, :], jnp.max(x, axis=0))


def _quant_dequant_kernel(mnmx_ref, x_ref, o_ref):
    """Pass 2 (large tensors): elementwise quantize -> clamp -> round -> dequantize."""
    mn = mnmx_ref[0] - EPS            # zero_point
    mx = mnmx_ref[1] + EPS
    scale = NUM_BINS / (mx - mn)
    inv_scale = (mx - mn) / NUM_BINS
    x = x_ref[...].astype(jnp.float32)
    q = jnp.round(jnp.clip((x - mn) * scale, 0.0, NUM_BINS))
    o_ref[...] = (q * inv_scale + mn).astype(o_ref.dtype)


def _pick_tile_groups(g, cap):
    t = min(g, cap)
    while g % t != 0:
        t -= 1
    return t


def quant_measure(x, *, force_two_pass=False, max_tile_groups=MAX_TILE_GROUPS):
    """Pallas implementation of QuantMeasure.forward (ScalarPreconditionerAct, 8-bit)."""
    orig_shape = x.shape
    orig_dtype = x.dtype
    total = x.size
    assert total % GROUP == 0, "example sized so flatten divides the (8,128) vreg tile"
    g = total // GROUP
    x3 = x.reshape(g, SUBLANES, LANES)   # layout-only; quantizer is a global transform

    fused = (not force_two_pass) and (total * 4 <= FUSED_MAX_BYTES)
    if fused:
        out3 = pl.pallas_call(
            _fused_kernel,
            out_shape=jax.ShapeDtypeStruct((g, SUBLANES, LANES), orig_dtype),
            in_specs=[pl.BlockSpec(memory_space=pltpu.MemorySpace.VMEM)],
            out_specs=pl.BlockSpec(memory_space=pltpu.MemorySpace.VMEM),
        )(x3)
        return out3.reshape(orig_shape)

    tile_g = _pick_tile_groups(g, max_tile_groups)
    n_tiles = g // tile_g

    # Pass 1: (8,128) partial min/max accumulators, resident across the grid.
    partials = pl.pallas_call(
        _minmax_partial_kernel,
        out_shape=jax.ShapeDtypeStruct((2, SUBLANES, LANES), jnp.float32),
        grid_spec=pltpu.PrefetchScalarGridSpec(
            num_scalar_prefetch=0,
            grid=(n_tiles,),
            in_specs=[pl.BlockSpec((tile_g, SUBLANES, LANES), lambda i: (i, 0, 0))],
            out_specs=pl.BlockSpec((2, SUBLANES, LANES), lambda i: (0, 0, 0)),
        ),
        compiler_params=pltpu.CompilerParams(
            dimension_semantics=("arbitrary",)),
    )(x3)

    # Tiny final reduce (1024 elems each) in the wrapper; pack scalars for SMEM.
    mn = jnp.min(partials[0])
    mx = jnp.max(partials[1])
    mnmx = jnp.stack([mn, mx])           # (2,) float32

    # Pass 2: elementwise fake-quantization using the packed global scalars.
    out3 = pl.pallas_call(
        _quant_dequant_kernel,
        out_shape=jax.ShapeDtypeStruct((g, SUBLANES, LANES), orig_dtype),
        grid_spec=pltpu.PrefetchScalarGridSpec(
            num_scalar_prefetch=0,
            grid=(n_tiles,),
            in_specs=[pl.BlockSpec(memory_space=pltpu.MemorySpace.SMEM),
                      pl.BlockSpec((tile_g, SUBLANES, LANES), lambda i: (i, 0, 0))],
            out_specs=pl.BlockSpec((tile_g, SUBLANES, LANES), lambda i: (i, 0, 0)),
        ),
        compiler_params=pltpu.CompilerParams(
            dimension_semantics=("parallel",)),
    )(mnmx, x3)

    return out3.reshape(orig_shape)


def _reference(x):
    """Pure-JAX reference mirroring ScalarPreconditionerAct + UniformQuantize."""
    xf = x.astype(jnp.float32)
    mn = jnp.min(xf) - EPS
    mx = jnp.max(xf) + EPS
    scale = NUM_BINS / (mx - mn)
    q = jnp.round(jnp.clip((xf - mn) * scale, 0.0, NUM_BINS))
    return (q / scale + mn).astype(x.dtype)


if __name__ == "__main__":
    key = jax.random.PRNGKey(0)
    # NCHW activation tensor, like the PyTorch conv-activation use-case.
    x = jax.random.normal(key, (2, 4, 16, 16), dtype=jnp.float32)

    out = jax.block_until_ready(quant_measure(x))          # fused single-pass path
    ref = _reference(x)
    assert out.shape == x.shape and out.dtype == x.dtype
    assert jnp.allclose(out, ref, atol=1e-5, rtol=1e-5), "fused path mismatch"

    # Also exercise the large-activation two-pass path with a multi-step
    # reduction grid (vreg-wide accumulator across several tiles).
    xb = jax.random.normal(jax.random.PRNGKey(1), (8, 8, 32, 32), dtype=jnp.float32)
    outb = jax.block_until_ready(
        quant_measure(xb, force_two_pass=True, max_tile_groups=16))
    assert jnp.allclose(outb, _reference(xb), atol=1e-5, rtol=1e-5), \
        "two-pass path mismatch"

    print("KERNEL_OK")
</pallas_src>

<mosaic_0001>
module attributes {stable_mosaic.version = 11 : i64} {
  func.func @_fused_kernel(%arg0: memref<2x8x128xf32, #tpu.memory_space<vmem>>, %arg1: memref<2x8x128xf32, #tpu.memory_space<vmem>>) attributes {dimension_semantics = [], scalar_prefetch = 0 : i64, scratch_operands = 0 : i64, tpu.core_type = #tpu.core_type<tc>} {
    %c0 = arith.constant 0 : index
    %c0_0 = arith.constant 0 : index
    %c0_1 = arith.constant 0 : index
    %0 = vector.load %arg0[%c0, %c0_0, %c0_1] : memref<2x8x128xf32, #tpu.memory_space<vmem>>, vector<2x8x128xf32>
    %1 = vector.shape_cast %0 : vector<2x8x128xf32> to vector<1x2x8x128xf32>
    %cst = arith.constant dense<0x7F800000> : vector<1xf32>
    %2 = vector.multi_reduction <minimumf>, %1, %cst [1, 2, 3] : vector<1x2x8x128xf32> to vector<1xf32>
    %3 = vector.shape_cast %2 : vector<1xf32> to vector<1x1x1x1xf32>
    %4 = vector.extract %3[0, 0, 0, 0] : f32 from vector<1x1x1x1xf32>
    %cst_2 = arith.constant 9.99999993E-9 : f32
    %5 = arith.subf %4, %cst_2 : f32
    %6 = vector.shape_cast %0 : vector<2x8x128xf32> to vector<1x2x8x128xf32>
    %cst_3 = arith.constant dense<0xFF800000> : vector<1xf32>
    %7 = vector.multi_reduction <maximumf>, %6, %cst_3 [1, 2, 3] : vector<1x2x8x128xf32> to vector<1xf32>
    %8 = vector.shape_cast %7 : vector<1xf32> to vector<1x1x1x1xf32>
    %9 = vector.extract %8[0, 0, 0, 0] : f32 from vector<1x1x1x1xf32>
    %cst_4 = arith.constant 9.99999993E-9 : f32
    %10 = arith.addf %9, %cst_4 : f32
    %11 = arith.subf %10, %5 : f32
    %cst_5 = arith.constant 2.550000e+02 : f32
    %12 = arith.divf %cst_5, %11 : f32
    %13 = arith.subf %10, %5 : f32
    %cst_6 = arith.constant 2.550000e+02 : f32
    %14 = arith.divf %13, %cst_6 : f32
    %15 = vector.broadcast %5 : f32 to vector<2x8x128xf32>
    %16 = arith.subf %0, %15 : vector<2x8x128xf32>
    %17 = vector.broadcast %12 : f32 to vector<2x8x128xf32>
    %18 = arith.mulf %16, %17 : vector<2x8x128xf32>
    %cst_7 = arith.constant 0.000000e+00 : f32
    %cst_8 = arith.constant 2.550000e+02 : f32
    %19 = vector.broadcast %cst_7 : f32 to vector<2x8x128xf32>
    %20 = arith.maximumf %19, %18 : vector<2x8x128xf32>
    %21 = vector.broadcast %cst_8 : f32 to vector<2x8x128xf32>
    %22 = arith.minimumf %21, %20 : vector<2x8x128xf32>
    %23 = math.roundeven %22 : vector<2x8x128xf32>
    %24 = vector.broadcast %14 : f32 to vector<2x8x128xf32>
    %25 = arith.mulf %23, %24 : vector<2x8x128xf32>
    %26 = vector.broadcast %5 : f32 to vector<2x8x128xf32>
    %27 = arith.addf %25, %26 : vector<2x8x128xf32>
    %c0_9 = arith.constant 0 : index
    %c0_10 = arith.constant 0 : index
    %c0_11 = arith.constant 0 : index
    %28 = vector.load %arg1[%c0_9, %c0_10, %c0_11] : memref<2x8x128xf32, #tpu.memory_space<vmem>>, vector<2x8x128xf32>
    tpu.vector_store %arg1[%c0_9, %c0_10, %c0_11], %27 {strides = array<i32>} : memref<2x8x128xf32, #tpu.memory_space<vmem>>, vector<2x8x128xf32>,
    return
  }
}

</mosaic_0001>

<llo_original>
// kernel: tpu_custom_call.1
$region0: #{tpu_custom_call.1}
  #allocation0 [shape = 'u32[]', space=smem, size = 0x4, offset = 0x4, fixed_abs, tag = 'smem constant byte address 0x4 - core index']
  #allocation1 [shape = 'u32[144,128]{1,0:T(1,128)}', space=vmem, size = 0x12000, scoped, tag = 'internal scratch']
  %s0 = inlined_call_operand.hbm [shape: f32[2,8,128], index: 0, kind: input, shape index: {}]
  %s1 = inlined_call_operand.hbm [shape: f32[2,8,128], index: 1, kind: output, shape index: {}]
  %s2 = sld [smem:[#allocation0]]
  $region18: #{tpu_custom_call.1} parent=0
    _
  %s4 = ssub.s32 1, %s2
  %s5 = scalar_select 0, %s4, %s2
  $region1: #{tpu_custom_call.1} parent=0
    #allocation2 [shape = 'u8[8192]{0}', space=vmem, size = 0x2000, scoped, tag = 'input window, operand 0, single buffered']
    #allocation3 [shape = 's32[1]{0}', space=sflag, size = 0x4, scoped, tag = 'scoped memory for tpu_custom_call.1']
    #allocation4 [shape = 's32[1]{0}', space=sflag, size = 0x4, scoped, tag = 'scoped memory for tpu_custom_call.1']
    #allocation5 [shape = 'u8[8192]{0}', space=vmem, size = 0x2000, scoped, tag = 'output window, operand 0, single buffered']
    %6 = vsyncpa [#allocation3], 0
    %7 = vsyncpa [#allocation4], 0
    // Predicated region
    $region2: #{tpu_custom_call.1} parent=1 // pred_check
      _
    $region3: #{tpu_custom_call.1} parent=1 // pred_check_branch
      %9 = sbr.rel (0) target = $region5
    $region4: #{tpu_custom_call.1} parent=1 // pred_region
      %s11 = ssub.s32 256, 256
      %12 = vsyncadd [#allocation3], %s11
      %s13 = sshll.u32 [#allocation2], 4
      %s14 = int_to_ptr.vmem [resolvable:$true] %s13
      %19 = dma.hbm_to_vmem [thread:$0]  %s0, 256, %s14, [#allocation3], 128, 128, 8
    $region5: #{tpu_custom_call.1} parent=1 // pred_fallthru
      _
    // Predicated region
    $region6: #{tpu_custom_call.1} parent=1 // pred_check
      _
    $region7: #{tpu_custom_call.1} parent=1 // pred_check_branch
      %21 = sbr.rel (0) target = $region9
    $region8: #{tpu_custom_call.1} parent=1 // pred_region
      %22 = dma.done [#allocation3], 256
    $region9: #{tpu_custom_call.1} parent=1 // pred_fallthru
      _
    %v23 = vld [vmem:[#allocation2] sm:$0xff]
    %v24 = vld [vmem:[#allocation2 + $0x8] sm:$0xff]
    %v25 = vmin.f32 %v23, %v24
    %26 = vmin.xlane.f32.xlu0 %v25
    %v27 = vpop.xlane.xlu0 %26
    %v28 = vrot.slane %v27, 4
    %v29 = vmin.f32 %v27, %v28
    %v30 = vrot.slane %v29, 2
    %v31 = vmin.f32 %v29, %v30
    %v32 = vrot.slane %v31, 1
    %v33 = vmin.f32 %v31, %v32
    %s34 = vtos %v33
    %s35 = ssub.f32 %s34, 1e-08
    %v36 = vmax.f32 %v23, %v24
    %37 = vmax.xlane.f32.xlu0 %v36
    %v38 = vpop.xlane.xlu0 %37
    %v39 = vrot.slane %v38, 4
    %v40 = vmax.f32 %v38, %v39
    %v41 = vrot.slane %v40, 2
    %v42 = vmax.f32 %v40, %v41
    %v43 = vrot.slane %v42, 1
    %v44 = vmax.f32 %v42, %v43
    %s45 = vtos %v44
    %s46 = sadd.f32 %s45, 1e-08
    %s47 = ssub.f32 %s46, %s35
    %v48 = vstv %s47
    %v49 = vrcp.pop %v48
    %s50 = vtos %v49
    %s51 = smul.f32 255.0, %s50
    %v52 = vrcp.pop 255.0
    %s53 = vtos %v52
    %s54 = smul.f32 %s47, %s53
    %v55 = vstv %s35
    %v56 = vsub.f32 %v23, %v55
    %v57 = vsub.f32 %v24, %v55
    %v58 = vstv %s51
    %v59 = vmul.f32 %v56, %v58
    %v60 = vmul.f32 %v57, %v58
    %v61 = vmax.f32 %v59, 0.0
    %v62 = vmax.f32 %v60, 0.0
    %v63 = vmin.f32 %v61, 255.0
    %v64 = vmin.f32 %v62, 255.0
    %v65 = vround.ne.pseudo %v63
    %v66 = vround.ne.pseudo %v64
    %v67 = vstv %s54
    %v68 = vmul.f32 %v65, %v67
    %v69 = vmul.f32 %v66, %v67
    %v70 = vadd.f32 %v68, %v55
    %v71 = vadd.f32 %v69, %v55
    %72 = vst [vmem:[#allocation5] sm:$0xff] %v70
    %73 = vst [vmem:[#allocation5 + $0x8] sm:$0xff] %v71
    // Predicated region
    $region10: #{tpu_custom_call.1} parent=1 // pred_check
      _
    $region11: #{tpu_custom_call.1} parent=1 // pred_check_branch
      %75 = sbr.rel (0) target = $region13
    $region12: #{tpu_custom_call.1} parent=1 // pred_region
      %s77 = ssub.s32 256, 256
      %78 = vsyncadd [#allocation4], %s77
      %s79 = sshll.u32 [#allocation5], 4
      %s80 = int_to_ptr.vmem [resolvable:$true] %s79
      %85 = dma.vmem_to_hbm [thread:$0]  %s80, 256, %s1, [#allocation4], 128, 128, 8
    $region13: #{tpu_custom_call.1} parent=1 // pred_fallthru
      _
    // Predicated region
    $region14: #{tpu_custom_call.1} parent=1 // pred_check
      _
    $region15: #{tpu_custom_call.1} parent=1 // pred_check_branch
      %87 = sbr.rel (0) target = $region17
    $region16: #{tpu_custom_call.1} parent=1 // pred_region
      %88 = dma.done [#allocation4], 256
    $region17: #{tpu_custom_call.1} parent=1 // pred_fallthru
      _
    %89 = vsyncpa [#allocation3], 1
    %90 = vsyncpa [#allocation4], 1

</llo_original>
